<compile_context>
chip_gen: v6e
topology: v6e:2x2x1
jax: 0.10.0
libtpu: 0.0.40
codegen_flags: <defaults>
</compile_context>

<pallas_src>
import functools

import jax
import jax.numpy as jnp
from jax import lax
from jax.experimental import pallas as pl
from jax.experimental.pallas import tpu as pltpu


KERNEL_SIZE = 5  # the module's only "parameter" (no learned weights)


def _decomp_kernel(x_ref, res_ref, mean_ref, *, kernel_size, front_n, end_n):
    # x_ref / res_ref / mean_ref: (TB, L, C) VMEM tiles.
    tb, L, C = x_ref.shape
    inv_k = jnp.float32(1.0 / kernel_size)

    # Boundary masks depend only on the row (sublane) index -> hoist them out
    # of the batch loop.  mask[d] marks rows whose window tap at offset d
    # falls outside [0, L-1] and must be replaced by the replicated edge row.
    row_idx = lax.broadcasted_iota(jnp.int32, (L, C), 0)
    taps = [d for d in range(-front_n, end_n + 1) if d != 0]
    masks = {}
    for d in taps:
        if d > 0:
            masks[d] = row_idx >= L - d     # reads past the end -> last row
        else:
            masks[d] = row_idx < -d         # reads before start -> first row

    for b in range(tb):  # static unroll over the folded batch rows (tb <= 16)
        x = x_ref[b].astype(jnp.float32)                      # (L, C)
        first_b = jnp.broadcast_to(x[0:1, :], (L, C))         # replicate row 0
        last_b = jnp.broadcast_to(x[L - 1:L, :], (L, C))      # replicate row L-1

        acc = x  # tap at offset d == 0
        for d in taps:
            # rolled[i] = x[(i + d) mod L]  (XLU sublane rotation, static shift)
            rolled = pltpu.roll(x, (-d) % L, 0)
            fill = last_b if d > 0 else first_b
            acc = acc + jnp.where(masks[d], fill, rolled)

        mean = acc * inv_k
        mean_ref[b] = mean.astype(mean_ref.dtype)
        res_ref[b] = (x - mean).astype(res_ref.dtype)


def _pick_batch_tile(B, per_batch_bytes, target_bytes=1 << 20, max_rows=16):
    """Largest divisor of B (<= max_rows) whose block stays around ~1 MiB."""
    best = 1
    for d in range(1, B + 1):
        if B % d == 0 and d <= max_rows and d * per_batch_bytes <= target_bytes:
            best = d
    return best


def series_decomp(x, kernel_size=KERNEL_SIZE):
    """x: (B, L, C) -> (res, moving_mean), both (B, L, C)."""
    B, L, C = x.shape
    front_n = (kernel_size - 1) // 2
    end_n = (kernel_size - 1) // 2 if kernel_size % 2 != 0 else kernel_size // 2

    itemsize = jnp.dtype(x.dtype).itemsize
    per_batch_bytes = L * C * itemsize
    tb = _pick_batch_tile(B, per_batch_bytes)
    block_bytes = tb * per_batch_bytes

    # VMEM budget: double-buffered (1 input + 2 output) blocks plus f32
    # compute temporaries, with slack; capped at v7x's 64 MiB physical VMEM.
    vmem_limit = int(min(64 << 20, max(32 << 20, 16 * block_bytes + (4 << 20))))
    # TODO(synk): for very large L*C (single-row block >> 8 MiB) tile the L
    # axis with a (kernel_size-1)-row halo so the budget stays under v7x's
    # 64 MiB VMEM; not needed at BIVA-scale shapes.

    kernel = functools.partial(
        _decomp_kernel, kernel_size=kernel_size, front_n=front_n, end_n=end_n)

    res, mean = pl.pallas_call(
        kernel,
        out_shape=(
            jax.ShapeDtypeStruct((B, L, C), x.dtype),
            jax.ShapeDtypeStruct((B, L, C), x.dtype),
        ),
        grid_spec=pltpu.PrefetchScalarGridSpec(
            num_scalar_prefetch=0,
            grid=(B // tb,),
            in_specs=[
                pl.BlockSpec((tb, L, C), lambda i: (i, 0, 0)),
            ],
            out_specs=[
                pl.BlockSpec((tb, L, C), lambda i: (i, 0, 0)),
                pl.BlockSpec((tb, L, C), lambda i: (i, 0, 0)),
            ],
        ),
        compiler_params=pltpu.CompilerParams(
            dimension_semantics=("parallel",),
            vmem_limit_bytes=vmem_limit),
    )(x)
    return res, mean


def _reference(x, kernel_size=KERNEL_SIZE):
    # Pure-JAX reference of the PyTorch forward, for correctness checking.
    B, L, C = x.shape
    front_n = (kernel_size - 1) // 2
    end_n = (kernel_size - 1) // 2 if kernel_size % 2 != 0 else kernel_size // 2
    front = jnp.broadcast_to(x[:, 0:1, :], (B, front_n, C))
    end = jnp.broadcast_to(x[:, -1:, :], (B, end_n, C))
    xpad = jnp.concatenate([front, x, end], axis=1)
    windows = jnp.stack([xpad[:, j:j + L, :] for j in range(kernel_size)], axis=0)
    mean = jnp.mean(windows, axis=0)
    return x - mean, mean


if __name__ == "__main__":
    key = jax.random.PRNGKey(0)
    B, L, C = 2, 16, 8
    x = jax.random.normal(key, (B, L, C), dtype=jnp.float32)

    res, mean = series_decomp(x, KERNEL_SIZE)
    jax.block_until_ready((res, mean))

    res_ref, mean_ref = _reference(x, KERNEL_SIZE)
    assert jnp.allclose(mean, mean_ref, atol=1e-5), "moving_mean mismatch"
    assert jnp.allclose(res, res_ref, atol=1e-5), "res mismatch"

    print("KERNEL_OK")
</pallas_src>

<mosaic_0001>
module attributes {stable_mosaic.version = 11 : i64} {
  func.func @_decomp_kernel(%arg0: i32, %arg1: memref<2x16x8xf32, #tpu.memory_space<vmem>>, %arg2: memref<2x16x8xf32, #tpu.memory_space<vmem>>, %arg3: memref<2x16x8xf32, #tpu.memory_space<vmem>>) attributes {dimension_semantics = [#tpu.dimension_semantics<parallel>], iteration_bounds = array<i64: 1>, scalar_prefetch = 0 : i64, scratch_operands = 0 : i64, tpu.core_type = #tpu.core_type<tc>, window_params = [{transform_indices = @transform_0, window_bounds = array<i64: 2, 16, 8>}, {transform_indices = @transform_1, window_bounds = array<i64: 2, 16, 8>}, {transform_indices = @transform_2, window_bounds = array<i64: 2, 16, 8>}]} {
    %0 = tpu.iota {dimensions = array<i32: 0>} : vector<16x8xi32>
    %c2_i32 = arith.constant 2 : i32
    %1 = vector.broadcast %c2_i32 : i32 to vector<16x8xi32>
    %2 = arith.cmpi slt, %0, %1 : vector<16x8xi32>
    %c1_i32 = arith.constant 1 : i32
    %3 = vector.broadcast %c1_i32 : i32 to vector<16x8xi32>
    %4 = arith.cmpi slt, %0, %3 : vector<16x8xi32>
    %c15_i32 = arith.constant 15 : i32
    %5 = vector.broadcast %c15_i32 : i32 to vector<16x8xi32>
    %6 = arith.cmpi sge, %0, %5 : vector<16x8xi32>
    %c14_i32 = arith.constant 14 : i32
    %7 = vector.broadcast %c14_i32 : i32 to vector<16x8xi32>
    %8 = arith.cmpi sge, %0, %7 : vector<16x8xi32>
    %c0 = arith.constant 0 : index
    %c0_0 = arith.constant 0 : index
    %c0_1 = arith.constant 0 : index
    %9 = vector.load %arg1[%c0, %c0_0, %c0_1] : memref<2x16x8xf32, #tpu.memory_space<vmem>>, vector<1x16x8xf32>
    %10 = vector.shape_cast %9 : vector<1x16x8xf32> to vector<16x8xf32>
    %11 = vector.extract_strided_slice %10 {offsets = [0, 0], sizes = [1, 8], strides = [1, 1]} : vector<16x8xf32> to vector<1x8xf32>
    %12 = vector.shape_cast %11 : vector<1x8xf32> to vector<1x8xf32>
    %13 = vector.broadcast %12 : vector<1x8xf32> to vector<16x8xf32>
    %14 = vector.extract_strided_slice %10 {offsets = [15, 0], sizes = [1, 8], strides = [1, 1]} : vector<16x8xf32> to vector<1x8xf32>
    %15 = vector.shape_cast %14 : vector<1x8xf32> to vector<1x8xf32>
    %16 = vector.broadcast %15 : vector<1x8xf32> to vector<16x8xf32>
    %c2_i32_2 = arith.constant 2 : i32
    %17 = tpu.dynamic_rotate %10 by %c2_i32_2 dim 0 : vector<16x8xf32>, i32 -> vector<16x8xf32>
    %18 = arith.select %2, %13, %17 : vector<16x8xi1>, vector<16x8xf32>
    %19 = arith.addf %10, %18 : vector<16x8xf32>
    %c1_i32_3 = arith.constant 1 : i32
    %20 = tpu.dynamic_rotate %10 by %c1_i32_3 dim 0 : vector<16x8xf32>, i32 -> vector<16x8xf32>
    %21 = arith.select %4, %13, %20 : vector<16x8xi1>, vector<16x8xf32>
    %22 = arith.addf %19, %21 : vector<16x8xf32>
    %c15_i32_4 = arith.constant 15 : i32
    %23 = tpu.dynamic_rotate %10 by %c15_i32_4 dim 0 : vector<16x8xf32>, i32 -> vector<16x8xf32>
    %24 = arith.select %6, %16, %23 : vector<16x8xi1>, vector<16x8xf32>
    %25 = arith.addf %22, %24 : vector<16x8xf32>
    %c14_i32_5 = arith.constant 14 : i32
    %26 = tpu.dynamic_rotate %10 by %c14_i32_5 dim 0 : vector<16x8xf32>, i32 -> vector<16x8xf32>
    %27 = arith.select %8, %16, %26 : vector<16x8xi1>, vector<16x8xf32>
    %28 = arith.addf %25, %27 : vector<16x8xf32>
    %cst = arith.constant 2.000000e-01 : f32
    %29 = vector.broadcast %cst : f32 to vector<16x8xf32>
    %30 = arith.mulf %28, %29 : vector<16x8xf32>
    %c0_6 = arith.constant 0 : index
    %c0_7 = arith.constant 0 : index
    %c0_8 = arith.constant 0 : index
    %31 = vector.load %arg3[%c0_6, %c0_7, %c0_8] : memref<2x16x8xf32, #tpu.memory_space<vmem>>, vector<1x16x8xf32>
    %32 = vector.shape_cast %31 : vector<1x16x8xf32> to vector<16x8xf32>
    %33 = vector.shape_cast %30 : vector<16x8xf32> to vector<1x16x8xf32>
    tpu.vector_store %arg3[%c0_6, %c0_7, %c0_8], %33 {strides = array<i32>} : memref<2x16x8xf32, #tpu.memory_space<vmem>>, vector<1x16x8xf32>,
    %34 = arith.subf %10, %30 : vector<16x8xf32>
    %c0_9 = arith.constant 0 : index
    %c0_10 = arith.constant 0 : index
    %c0_11 = arith.constant 0 : index
    %35 = vector.load %arg2[%c0_9, %c0_10, %c0_11] : memref<2x16x8xf32, #tpu.memory_space<vmem>>, vector<1x16x8xf32>
    %36 = vector.shape_cast %35 : vector<1x16x8xf32> to vector<16x8xf32>
    %37 = vector.shape_cast %34 : vector<16x8xf32> to vector<1x16x8xf32>
    tpu.vector_store %arg2[%c0_9, %c0_10, %c0_11], %37 {strides = array<i32>} : memref<2x16x8xf32, #tpu.memory_space<vmem>>, vector<1x16x8xf32>,
    %c1 = arith.constant 1 : index
    %c0_12 = arith.constant 0 : index
    %c0_13 = arith.constant 0 : index
    %38 = vector.load %arg1[%c1, %c0_12, %c0_13] : memref<2x16x8xf32, #tpu.memory_space<vmem>>, vector<1x16x8xf32>
    %39 = vector.shape_cast %38 : vector<1x16x8xf32> to vector<16x8xf32>
    %40 = vector.extract_strided_slice %39 {offsets = [0, 0], sizes = [1, 8], strides = [1, 1]} : vector<16x8xf32> to vector<1x8xf32>
    %41 = vector.shape_cast %40 : vector<1x8xf32> to vector<1x8xf32>
    %42 = vector.broadcast %41 : vector<1x8xf32> to vector<16x8xf32>
    %43 = vector.extract_strided_slice %39 {offsets = [15, 0], sizes = [1, 8], strides = [1, 1]} : vector<16x8xf32> to vector<1x8xf32>
    %44 = vector.shape_cast %43 : vector<1x8xf32> to vector<1x8xf32>
    %45 = vector.broadcast %44 : vector<1x8xf32> to vector<16x8xf32>
    %c2_i32_14 = arith.constant 2 : i32
    %46 = tpu.dynamic_rotate %39 by %c2_i32_14 dim 0 : vector<16x8xf32>, i32 -> vector<16x8xf32>
    %47 = arith.select %2, %42, %46 : vector<16x8xi1>, vector<16x8xf32>
    %48 = arith.addf %39, %47 : vector<16x8xf32>
    %c1_i32_15 = arith.constant 1 : i32
    %49 = tpu.dynamic_rotate %39 by %c1_i32_15 dim 0 : vector<16x8xf32>, i32 -> vector<16x8xf32>
    %50 = arith.select %4, %42, %49 : vector<16x8xi1>, vector<16x8xf32>
    %51 = arith.addf %48, %50 : vector<16x8xf32>
    %c15_i32_16 = arith.constant 15 : i32
    %52 = tpu.dynamic_rotate %39 by %c15_i32_16 dim 0 : vector<16x8xf32>, i32 -> vector<16x8xf32>
    %53 = arith.select %6, %45, %52 : vector<16x8xi1>, vector<16x8xf32>
    %54 = arith.addf %51, %53 : vector<16x8xf32>
    %c14_i32_17 = arith.constant 14 : i32
    %55 = tpu.dynamic_rotate %39 by %c14_i32_17 dim 0 : vector<16x8xf32>, i32 -> vector<16x8xf32>
    %56 = arith.select %8, %45, %55 : vector<16x8xi1>, vector<16x8xf32>
    %57 = arith.addf %54, %56 : vector<16x8xf32>
    %cst_18 = arith.constant 2.000000e-01 : f32
    %58 = vector.broadcast %cst_18 : f32 to vector<16x8xf32>
    %59 = arith.mulf %57, %58 : vector<16x8xf32>
    %c1_19 = arith.constant 1 : index
    %c0_20 = arith.constant 0 : index
    %c0_21 = arith.constant 0 : index
    %60 = vector.load %arg3[%c1_19, %c0_20, %c0_21] : memref<2x16x8xf32, #tpu.memory_space<vmem>>, vector<1x16x8xf32>
    %61 = vector.shape_cast %60 : vector<1x16x8xf32> to vector<16x8xf32>
    %62 = vector.shape_cast %59 : vector<16x8xf32> to vector<1x16x8xf32>
    tpu.vector_store %arg3[%c1_19, %c0_20, %c0_21], %62 {strides = array<i32>} : memref<2x16x8xf32, #tpu.memory_space<vmem>>, vector<1x16x8xf32>,
    %63 = arith.subf %39, %59 : vector<16x8xf32>
    %c1_22 = arith.constant 1 : index
    %c0_23 = arith.constant 0 : index
    %c0_24 = arith.constant 0 : index
    %64 = vector.load %arg2[%c1_22, %c0_23, %c0_24] : memref<2x16x8xf32, #tpu.memory_space<vmem>>, vector<1x16x8xf32>
    %65 = vector.shape_cast %64 : vector<1x16x8xf32> to vector<16x8xf32>
    %66 = vector.shape_cast %63 : vector<16x8xf32> to vector<1x16x8xf32>
    tpu.vector_store %arg2[%c1_22, %c0_23, %c0_24], %66 {strides = array<i32>} : memref<2x16x8xf32, #tpu.memory_space<vmem>>, vector<1x16x8xf32>,
    return
  }
  func.func @transform_0(%arg0: i32) -> (i32, i32, i32) {
    %c0_i32 = arith.constant 0 : i32
    %c0_i32_0 = arith.constant 0 : i32
    %c0_i32_1 = arith.constant 0 : i32
    return %arg0, %c0_i32, %c0_i32_0 : i32, i32, i32
  }
  func.func @transform_1(%arg0: i32) -> (i32, i32, i32) {
    %c0_i32 = arith.constant 0 : i32
    %c0_i32_0 = arith.constant 0 : i32
    %c0_i32_1 = arith.constant 0 : i32
    return %arg0, %c0_i32, %c0_i32_0 : i32, i32, i32
  }
  func.func @transform_2(%arg0: i32) -> (i32, i32, i32) {
    %c0_i32 = arith.constant 0 : i32
    %c0_i32_0 = arith.constant 0 : i32
    %c0_i32_1 = arith.constant 0 : i32
    return %arg0, %c0_i32, %c0_i32_0 : i32, i32, i32
  }
}

</mosaic_0001>

<llo_original>
// kernel: tpu_custom_call.1
$region0: #{tpu_custom_call.1}
  #allocation0 [shape = 'u32[]', space=smem, size = 0x4, offset = 0x4, fixed_abs, tag = 'smem constant byte address 0x4 - core index']
  #allocation1 [shape = 'u32[144,128]{1,0:T(1,128)}', space=vmem, size = 0x12000, scoped, tag = 'internal scratch']
  %s0 = inlined_call_operand.vmem [shape: f32[2,16,8], index: 0, kind: input, shape index: {}]
  %s1 = inlined_call_operand.vmem [shape: f32[2,16,8], index: 1, kind: output, shape index: {0}]
  %s2 = inlined_call_operand.vmem [shape: f32[2,16,8], index: 2, kind: output, shape index: {1}]
  %3 = xla_tuple %s1, %s2
  %s4 = sld [smem:[#allocation0]]
  $region22: #{tpu_custom_call.1} parent=0
    _
  %s6 = ssub.s32 1, %s4
  %s7 = scalar_select 0, %s6, %s4
  // Predicated region
  $region2: #{tpu_custom_call.1} parent=0 // pred_check
    _
  $region3: #{tpu_custom_call.1} parent=0 // pred_check_branch
    %9 = sbr.rel (0) target = $region5
  $region4: #{tpu_custom_call.1} parent=0 // pred_region
    _
  $region5: #{tpu_custom_call.1} parent=0 // pred_fallthru
    _
  %v10 = vlaneseq
  %v11 = vshrl.u32 %v10, 7
  %v12 = vadd.s32 %v11, 8
  %vm13 = vcmp.lt.s32.totalorder %v11, 2
  %vm14 = vcmp.lt.s32.totalorder %v12, 2
  %vm15 = vcmp.lt.s32.totalorder %v11, 1
  %vm16 = vcmp.lt.s32.totalorder %v12, 1
  %vm17 = vcmp.ge.s32.totalorder %v11, 15
  %vm18 = vcmp.ge.s32.totalorder %v12, 15
  %vm19 = vcmp.ge.s32.totalorder %v11, 14
  %vm20 = vcmp.ge.s32.totalorder %v12, 14
  %v21 = vld [vmem:[%s0] sm:$0xff]
  %v22 = vld [vmem:[%s0 + $0x8] sm:$0xff]
  %v23 = vlaneseq
  %v24 = vshrl.u32 %v23, 7
  %v25 = vsub.s32 0, %v24
  %v26 = vrot.slane %v21, %v25
  %v27 = vlaneseq
  %v28 = vshrl.u32 %v27, 7
  %v29 = vsub.s32 7, %v28
  %v30 = vrot.slane %v22, %v29
  %v31 = vrot.slane %v21, 6
  %v32 = vrot.slane %v22, 6
  %v33 = vsel %vm13, %v31, %v32
  %v34 = vsel %vm13, %v32, %v31
  %v35 = vsel %vm13, %v26, %v34
  %v36 = vsel %vm14, %v26, %v33
  %v37 = vadd.f32 %v21, %v35
  %v38 = vadd.f32 %v22, %v36
  %v39 = vrot.slane %v21, 7
  %v40 = vrot.slane %v22, 7
  %v41 = vsel %vm15, %v39, %v40
  %v42 = vsel %vm15, %v40, %v39
  %v43 = vsel %vm15, %v26, %v42
  %v44 = vsel %vm16, %v26, %v41
  %v45 = vadd.f32 %v37, %v43
  %v46 = vadd.f32 %v38, %v44
  %v47 = vrot.slane %v21, 1
  %v48 = vrot.slane %v22, 1
  %vm49 = vcmp.lt.s32.totalorder %v11, 7
  %v50 = vsel %vm49, %v47, %v48
  %v51 = vsel %vm49, %v48, %v47
  %v52 = vsel %vm17, %v30, %v50
  %v53 = vsel %vm18, %v30, %v51
  %v54 = vadd.f32 %v45, %v52
  %v55 = vadd.f32 %v46, %v53
  %v56 = vrot.slane %v21, 2
  %v57 = vrot.slane %v22, 2
  %vm58 = vcmp.lt.s32.totalorder %v11, 6
  %v59 = vsel %vm58, %v56, %v57
  %v60 = vsel %vm58, %v57, %v56
  %v61 = vsel %vm19, %v30, %v59
  %v62 = vsel %vm20, %v30, %v60
  %v63 = vadd.f32 %v54, %v61
  %v64 = vadd.f32 %v55, %v62
  %v65 = vmul.f32 %v63, 0.2
  %v66 = vmul.f32 %v64, 0.2
  %vm67 = vcmask 64512
  %68 = vst.msk [vmem:[%s2] sm:$0xff] %vm67, %v65
  %69 = vst.msk [vmem:[%s2 + $0x8] sm:$0xff] %vm67, %v66
  %v70 = vsub.f32 %v21, %v65
  %v71 = vsub.f32 %v22, %v66
  %72 = vst.msk [vmem:[%s1] sm:$0xff] %vm67, %v70
  %73 = vst.msk [vmem:[%s1 + $0x8] sm:$0xff] %vm67, %v71
  %s74 = scalar_lea.vmem %s0, 16
  %v75 = vld [vmem:[%s74] sm:$0xff]
  %v76 = vld [vmem:[%s74 + $0x8] sm:$0xff]
  %v77 = vlaneseq
  %v78 = vshrl.u32 %v77, 7
  %v79 = vsub.s32 0, %v78
  %v80 = vrot.slane %v75, %v79
  %v81 = vlaneseq
  %v82 = vshrl.u32 %v81, 7
  %v83 = vsub.s32 7, %v82
  %v84 = vrot.slane %v76, %v83
  %v85 = vrot.slane %v75, 6
  %v86 = vrot.slane %v76, 6
  %v87 = vsel %vm13, %v85, %v86
  %v88 = vsel %vm13, %v86, %v85
  %v89 = vsel %vm13, %v80, %v88
  %v90 = vsel %vm14, %v80, %v87
  %v91 = vadd.f32 %v75, %v89
  %v92 = vadd.f32 %v76, %v90
  %v93 = vrot.slane %v75, 7
  %v94 = vrot.slane %v76, 7
  %v95 = vsel %vm15, %v93, %v94
  %v96 = vsel %vm15, %v94, %v93
  %v97 = vsel %vm15, %v80, %v96
  %v98 = vsel %vm16, %v80, %v95
  %v99 = vadd.f32 %v91, %v97
  %v100 = vadd.f32 %v92, %v98
  %v101 = vrot.slane %v75, 1
  %v102 = vrot.slane %v76, 1
  %v103 = vsel %vm49, %v101, %v102
  %v104 = vsel %vm49, %v102, %v101
  %v105 = vsel %vm17, %v84, %v103
  %v106 = vsel %vm18, %v84, %v104
  %v107 = vadd.f32 %v99, %v105
  %v108 = vadd.f32 %v100, %v106
  %v109 = vrot.slane %v75, 2
  %v110 = vrot.slane %v76, 2
  %v111 = vsel %vm58, %v109, %v110
  %v112 = vsel %vm58, %v110, %v109
  %v113 = vsel %vm19, %v84, %v111
  %v114 = vsel %vm20, %v84, %v112
  %v115 = vadd.f32 %v107, %v113
  %v116 = vadd.f32 %v108, %v114
  %v117 = vmul.f32 %v115, 0.2
  %v118 = vmul.f32 %v116, 0.2
  %s119 = scalar_lea.vmem %s2, 16
  %120 = vst.msk [vmem:[%s119] sm:$0xff] %vm67, %v117
  %121 = vst.msk [vmem:[%s119 + $0x8] sm:$0xff] %vm67, %v118
  %v122 = vsub.f32 %v75, %v117
  %v123 = vsub.f32 %v76, %v118
  %s124 = scalar_lea.vmem %s1, 16
  %125 = vst.msk [vmem:[%s124] sm:$0xff] %vm67, %v122
  %126 = vst.msk [vmem:[%s124 + $0x8] sm:$0xff] %vm67, %v123
  // Predicated region
  $region6: #{tpu_custom_call.1} parent=0 // pred_check
    _
  $region7: #{tpu_custom_call.1} parent=0 // pred_check_branch
    %128 = sbr.rel (0) target = $region9
  $region8: #{tpu_custom_call.1} parent=0 // pred_region
    _
  $region9: #{tpu_custom_call.1} parent=0 // pred_fallthru
    _
  // Predicated region
  $region10: #{tpu_custom_call.1} parent=0 // pred_check
    _
  $region11: #{tpu_custom_call.1} parent=0 // pred_check_branch
    %130 = sbr.rel (0) target = $region13
  $region12: #{tpu_custom_call.1} parent=0 // pred_region
    _
  $region13: #{tpu_custom_call.1} parent=0 // pred_fallthru
    _
  // Predicated region
  $region14: #{tpu_custom_call.1} parent=0 // pred_check
    _
  $region15: #{tpu_custom_call.1} parent=0 // pred_check_branch
    %132 = sbr.rel (0) target = $region17
  $region16: #{tpu_custom_call.1} parent=0 // pred_region
    _
  $region17: #{tpu_custom_call.1} parent=0 // pred_fallthru
    _
  // Predicated region
  $region18: #{tpu_custom_call.1} parent=0 // pred_check
    _
  $region19: #{tpu_custom_call.1} parent=0 // pred_check_branch
    %134 = sbr.rel (0) target = $region21
  $region20: #{tpu_custom_call.1} parent=0 // pred_region
    _
  $region21: #{tpu_custom_call.1} parent=0 // pred_fallthru
    _

</llo_original>
